<compile_context>
chip_gen: v7x
topology: tpu7x:2x2x1
jax: 0.10.0
libtpu: 0.0.40
codegen_flags: <defaults>
</compile_context>

<pallas_src>
import jax
import jax.numpy as jnp
from jax.experimental import pallas as pl
from jax.experimental.pallas import tpu as pltpu


# ----------------------------------------------------------------------------
# helpers
# ----------------------------------------------------------------------------
def _round_up(x, m):
    return ((x + m - 1) // m) * m


def _pick_tile(dim, pref, gran=128):
    """Largest tile <= pref that divides `dim` and is a multiple of `gran`;
    falls back to the full dim (always a legal Mosaic block)."""
    if dim <= pref:
        return dim
    t = (pref // gran) * gran
    while t >= gran:
        if dim % t == 0:
            return t
        t -= gran
    # TODO(synk): pad + mask non-divisible sequence lengths (e.g. ViT N=197) instead
    # of degrading to a full-dim block.
    return dim


def _vmem_limit_bytes():
    """Generation-aware scoped-VMEM limit: half the physical capacity, capped at
    64 MiB (v5e/v6e have 128 MiB physical VMEM, v7x only 64 MiB per TC)."""
    try:
        return int(min(64 * 1024 * 1024,
                       pltpu.get_tpu_info().vmem_capacity_bytes // 2))
    except Exception:
        return 32 * 1024 * 1024


# ----------------------------------------------------------------------------
# tiled linear:  (M, K) @ (K, N) -> (M, N)
# ----------------------------------------------------------------------------
def _linear_kernel(x_ref, w_ref, o_ref, acc_ref):
    @pl.when(pl.program_id(2) == 0)
    def _():
        acc_ref[...] = jnp.zeros(acc_ref.shape, dtype=acc_ref.dtype)

    acc_ref[...] += jnp.dot(
        x_ref[...], w_ref[...], preferred_element_type=jnp.float32
    )

    @pl.when(pl.program_id(2) == pl.num_programs(2) - 1)
    def _():
        o_ref[...] = acc_ref[...].astype(o_ref.dtype)


def pallas_linear(x, w, *, tm=512, tn=512, tk=512):
    """(M, K) @ (K, N) -> (M, N).  Rows are zero-padded (and sliced afterwards) so the
    intended row tile survives for non-tile-divisible M (e.g. B*N = B*197)."""
    M, K = x.shape
    K2, Nout = w.shape
    assert K == K2
    tn = _pick_tile(Nout, tn, gran=128)
    tk = _pick_tile(K, tk, gran=128)
    tm = min(tm, _round_up(M, 8))
    Mp = _round_up(M, tm)
    if Mp != M:
        x = jnp.pad(x, ((0, Mp - M), (0, 0)))
    grid = (Mp // tm, Nout // tn, K // tk)

    out = pl.pallas_call(
        _linear_kernel,
        out_shape=jax.ShapeDtypeStruct((Mp, Nout), x.dtype),
        grid=grid,
        in_specs=[
            pl.BlockSpec((tm, tk), lambda i, j, k: (i, k)),
            pl.BlockSpec((tk, tn), lambda i, j, k: (k, j)),
        ],
        out_specs=pl.BlockSpec((tm, tn), lambda i, j, k: (i, j)),
        scratch_shapes=[pltpu.VMEM((tm, tn), jnp.float32)],
        compiler_params=pltpu.CompilerParams(
            dimension_semantics=("parallel", "parallel", "arbitrary"),
            vmem_limit_bytes=_vmem_limit_bytes(),
        ),
    )(x, w)
    return out[:M] if Mp != M else out


# ----------------------------------------------------------------------------
# flash attention over the fused qkv tensor
# qkv: (B, N, 3, H, DH)  ->  out: (B, N, H*DH)
# (1/sqrt(DH) already folded into the q projection weights)
# ----------------------------------------------------------------------------
def _make_flash_attn_kernel(num_heads, head_dim, recip_approx):
    fused_store = (head_dim % 128 == 0)   # lane-multiple head dim -> single store

    def kernel(q_ref, k_ref, v_ref, o_ref, qh_sc, m_sc, l_sc, acc_sc):
        ki = pl.program_id(2)

        @pl.when(ki == 0)
        def _():
            # q block is invariant across the KV axis: relayout it once per q tile
            # and hold it in VMEM for the whole KV loop.
            qh_sc[...] = jnp.transpose(q_ref[...], (1, 0, 2))      # (H, tq, DH)
            m_sc[...] = jnp.full(m_sc.shape, -jnp.inf, dtype=m_sc.dtype)
            l_sc[...] = jnp.zeros(l_sc.shape, dtype=l_sc.dtype)
            acc_sc[...] = jnp.zeros(acc_sc.shape, dtype=acc_sc.dtype)

        q = qh_sc[...]                                             # (H, tq,  DH)
        k = jnp.transpose(k_ref[...], (1, 0, 2))                   # (H, tkv, DH)
        v = jnp.transpose(v_ref[...], (1, 0, 2))                   # (H, tkv, DH)

        # scores: contract the shared DH axis (no minor-dim k.T); f32 MXU accumulate.
        s = jnp.einsum("hqd,hkd->hqk", q, k,
                       preferred_element_type=jnp.float32)         # (H, tq, tkv)

        # online softmax; statistics stay f32.
        m_prev = m_sc[...]
        m_new = jnp.maximum(m_prev, jnp.max(s, axis=-1, keepdims=True))
        alpha = jnp.exp(m_prev - m_new)                            # (H, tq, 1)
        p = jnp.exp(s - m_new)                                     # (H, tq, tkv)

        l_sc[...] = alpha * l_sc[...] + jnp.sum(p, axis=-1, keepdims=True)
        acc_sc[...] = alpha * acc_sc[...] + jnp.einsum(
            "hqk,hkd->hqd", p.astype(v.dtype), v,
            preferred_element_type=jnp.float32)                    # (H, tq, DH)
        m_sc[...] = m_new

        @pl.when(ki == pl.num_programs(2) - 1)
        def _():
            # one reciprocal/divide + one normalize for all heads (f32)
            if recip_approx:
                o = acc_sc[...] * pl.reciprocal(l_sc[...], approx=True)
            else:
                o = acc_sc[...] / l_sc[...]                        # exact for f32 parity
            if fused_store:
                # merge heads in-register and emit a single lane-dense (tq, H*DH) store
                o_ref[...] = (
                    jnp.transpose(o, (1, 0, 2)).reshape(o_ref.shape).astype(o_ref.dtype)
                )
            else:
                # TODO(synk): use the fused single store for DH < 128 once the
                # sub-128 minor-dim merge reshape is verified to lower on Mosaic.
                o_cast = o.astype(o_ref.dtype)                     # one cast, all heads
                for h in range(num_heads):                         # static unroll
                    o_ref[:, h * head_dim:(h + 1) * head_dim] = o_cast[h]

    return kernel


def pallas_flash_attention(qkv, *, tq=128, tkv=256):
    """qkv: (B, N, 3, H, DH) -> (B, N, H*DH) via flash-style online softmax."""
    B, N, three, H, DH = qkv.shape
    assert three == 3
    D = H * DH
    tq = _pick_tile(N, tq, gran=8)
    tkv = _pick_tile(N, tkv, gran=8)
    grid = (B, N // tq, N // tkv)
    recip_approx = qkv.dtype != jnp.dtype(jnp.float32)   # exact divide on f32 paths

    kernel = _make_flash_attn_kernel(H, DH, recip_approx)
    return pl.pallas_call(
        kernel,
        out_shape=jax.ShapeDtypeStruct((B, N, D), qkv.dtype),
        grid=grid,
        in_specs=[
            # slot 0/1/2 of the fused qkv tensor selected by the index_map
            pl.BlockSpec((None, tq, None, H, DH), lambda b, qi, ki: (b, qi, 0, 0, 0)),
            pl.BlockSpec((None, tkv, None, H, DH), lambda b, qi, ki: (b, ki, 1, 0, 0)),
            pl.BlockSpec((None, tkv, None, H, DH), lambda b, qi, ki: (b, ki, 2, 0, 0)),
        ],
        # lane-dense output tile, resident across the KV axis
        out_specs=pl.BlockSpec((None, tq, D), lambda b, qi, ki: (b, qi, 0)),
        scratch_shapes=[
            pltpu.VMEM((H, tq, DH), qkv.dtype),     # hoisted/relayouted q tile
            pltpu.VMEM((H, tq, 1), jnp.float32),    # running max
            pltpu.VMEM((H, tq, 1), jnp.float32),    # running denominator
            pltpu.VMEM((H, tq, DH), jnp.float32),   # running weighted-value accumulator
        ],
        compiler_params=pltpu.CompilerParams(
            dimension_semantics=("parallel", "parallel", "arbitrary"),
            vmem_limit_bytes=_vmem_limit_bytes(),
        ),
    )(qkv, qkv, qkv)


# ----------------------------------------------------------------------------
# full forward (self_attn path of the PyTorch module)
# ----------------------------------------------------------------------------
def attention_forward(x, w_qkv, w_proj, num_heads, *,
                      attn_tq=128, attn_tkv=256,
                      lin_tm=512, lin_tn=512, lin_tk=512):
    """x: (B, N, D); w_qkv: (D, 3D); w_proj: (D, D) — weights pre-transposed to (in, out).
    qkv_bias=False, attn_drop=proj_drop=0 (identity)."""
    B, N, D = x.shape
    assert D % num_heads == 0
    DH = D // num_heads
    scale = float(DH) ** (-0.5)

    # fold 1/sqrt(DH) into the q columns of the fused qkv weight: zero in-kernel cost,
    # applied once in the weight's own precision.
    w_qkv_scaled = jnp.concatenate([w_qkv[:, :D] * scale, w_qkv[:, D:]], axis=1)

    # fused qkv projection (tiled Pallas matmul)
    qkv = pallas_linear(x.reshape(B * N, D), w_qkv_scaled,
                        tm=lin_tm, tn=lin_tn, tk=lin_tk)              # (B*N, 3D)
    # pure metadata reshape (no HBM transpose); the attention kernel gathers
    # q/k/v per slot via its BlockSpec index_maps.
    qkv = qkv.reshape(B, N, 3, num_heads, DH)

    o = pallas_flash_attention(qkv, tq=attn_tq, tkv=attn_tkv)         # (B, N, D)

    # output projection (proj bias = qkv_bias = False; proj_drop p=0 is identity)
    out = pallas_linear(o.reshape(B * N, D), w_proj,
                        tm=lin_tm, tn=lin_tn, tk=lin_tk)
    return out.reshape(B, N, D)


# ----------------------------------------------------------------------------
# main
# ----------------------------------------------------------------------------
if __name__ == "__main__":
    def reference(x, w_qkv, w_proj, num_heads):
        B, N, D = x.shape
        DH = D // num_heads
        scale = DH ** (-0.5)
        qkv = (x.reshape(B * N, D) @ w_qkv).reshape(B, N, 3, num_heads, DH)
        qkv = jnp.transpose(qkv, (2, 0, 3, 1, 4))
        q, k, v = qkv[0], qkv[1], qkv[2]
        s = jnp.einsum("bhqd,bhkd->bhqk", q, k) * scale
        p = jax.nn.softmax(s, axis=-1)
        o = jnp.einsum("bhqk,bhkd->bhqd", p, v)
        o = jnp.transpose(o, (0, 2, 1, 3)).reshape(B * N, D)
        return (o @ w_proj).reshape(B, N, D)

    # ---- small test (module-consistent shapes) -----------------------------
    B, N, D, H = 2, 8, 32, 4
    kx, kq, kp = jax.random.split(jax.random.PRNGKey(0), 3)
    x = jax.random.normal(kx, (B, N, D), dtype=jnp.float32)
    w_qkv = jax.random.normal(kq, (D, 3 * D), dtype=jnp.float32) * 0.02
    w_proj = jax.random.normal(kp, (D, D), dtype=jnp.float32) * 0.02

    out = attention_forward(x, w_qkv, w_proj, num_heads=H)
    jax.block_until_ready(out)
    assert out.shape == (B, N, D)
    exp = reference(x, w_qkv, w_proj, H)
    err = float(jnp.max(jnp.abs(out - exp)))
    assert jnp.allclose(out, exp, atol=1e-3, rtol=1e-3), f"max abs err {err}"

    # ---- larger test: exercises the flash KV loop and tiled-K accumulation --
    B2, N2, D2, H2 = 2, 256, 256, 4
    kx2, kq2, kp2 = jax.random.split(jax.random.PRNGKey(1), 3)
    x2 = jax.random.normal(kx2, (B2, N2, D2), dtype=jnp.float32)
    wq2 = jax.random.normal(kq2, (D2, 3 * D2), dtype=jnp.float32) * 0.02
    wp2 = jax.random.normal(kp2, (D2, D2), dtype=jnp.float32) * 0.02

    out2 = attention_forward(x2, wq2, wp2, num_heads=H2,
                             attn_tq=128, attn_tkv=128, lin_tk=128)
    jax.block_until_ready(out2)
    exp2 = reference(x2, wq2, wp2, H2)
    err2 = float(jnp.max(jnp.abs(out2 - exp2)))
    assert jnp.allclose(out2, exp2, atol=1e-3, rtol=1e-3), f"max abs err {err2}"

    print("KERNEL_OK")
</pallas_src>

<mosaic_0001>
module attributes {stable_mosaic.version = 11 : i64} {
  func.func @_linear_kernel(%arg0: i32, %arg1: i32, %arg2: i32, %arg3: memref<16x32xf32, #tpu.memory_space<vmem>>, %arg4: memref<32x96xf32, #tpu.memory_space<vmem>>, %arg5: memref<16x96xf32, #tpu.memory_space<vmem>>, %arg6: memref<16x96xf32, #tpu.memory_space<vmem>>) attributes {dimension_semantics = [#tpu.dimension_semantics<parallel>, #tpu.dimension_semantics<parallel>, #tpu.dimension_semantics<arbitrary>], iteration_bounds = array<i64: 1, 1, 1>, scalar_prefetch = 0 : i64, scratch_operands = 1 : i64, tpu.core_type = #tpu.core_type<tc>, window_params = [{transform_indices = @transform_0, window_bounds = array<i64: 16, 32>}, {transform_indices = @transform_1, window_bounds = array<i64: 32, 96>}, {transform_indices = @transform_2, window_bounds = array<i64: 16, 96>}]} {
    %c0_i32 = arith.constant 0 : i32
    %0 = arith.cmpi eq, %arg2, %c0_i32 : i32
    %1 = arith.extui %0 : i1 to i32
    %c0_i32_0 = arith.constant 0 : i32
    %2 = arith.cmpi ne, %1, %c0_i32_0 : i32
    scf.if %2 {
      %cst_10 = arith.constant 0.000000e+00 : f32
      %12 = vector.broadcast %cst_10 : f32 to vector<16x96xf32>
      %c0_11 = arith.constant 0 : index
      %c0_12 = arith.constant 0 : index
      %13 = vector.load %arg6[%c0_11, %c0_12] : memref<16x96xf32, #tpu.memory_space<vmem>>, vector<16x96xf32>
      tpu.vector_store %arg6[%c0_11, %c0_12], %12 {strides = array<i32>} : memref<16x96xf32, #tpu.memory_space<vmem>>, vector<16x96xf32>,
    } else {
    }
    %c0 = arith.constant 0 : index
    %c0_1 = arith.constant 0 : index
    %3 = vector.load %arg6[%c0, %c0_1] : memref<16x96xf32, #tpu.memory_space<vmem>>, vector<16x96xf32>
    %c0_2 = arith.constant 0 : index
    %c0_3 = arith.constant 0 : index
    %4 = vector.load %arg3[%c0_2, %c0_3] : memref<16x32xf32, #tpu.memory_space<vmem>>, vector<16x32xf32>
    %c0_4 = arith.constant 0 : index
    %c0_5 = arith.constant 0 : index
    %5 = vector.load %arg4[%c0_4, %c0_5] : memref<32x96xf32, #tpu.memory_space<vmem>>, vector<32x96xf32>
    %cst = arith.constant dense<0.000000e+00> : vector<16x96xf32>
    %6 = tpu.matmul %4, %5, %cst {dimension_numbers = #tpu.dot_dimension_numbers<[1], [0], [0], [1], [0, 0, 1, 1], [], []>} : vector<16x32xf32>, vector<32x96xf32>, vector<16x96xf32> -> vector<16x96xf32>
    %7 = arith.addf %3, %6 : vector<16x96xf32>
    %c0_6 = arith.constant 0 : index
    %c0_7 = arith.constant 0 : index
    %8 = vector.load %arg6[%c0_6, %c0_7] : memref<16x96xf32, #tpu.memory_space<vmem>>, vector<16x96xf32>
    tpu.vector_store %arg6[%c0_6, %c0_7], %7 {strides = array<i32>} : memref<16x96xf32, #tpu.memory_space<vmem>>, vector<16x96xf32>,
    %c0_i32_8 = arith.constant 0 : i32
    %9 = arith.cmpi eq, %arg2, %c0_i32_8 : i32
    %10 = arith.extui %9 : i1 to i32
    %c0_i32_9 = arith.constant 0 : i32
    %11 = arith.cmpi ne, %10, %c0_i32_9 : i32
    scf.if %11 {
      %c0_10 = arith.constant 0 : index
      %c0_11 = arith.constant 0 : index
      %12 = vector.load %arg6[%c0_10, %c0_11] : memref<16x96xf32, #tpu.memory_space<vmem>>, vector<16x96xf32>
      %c0_12 = arith.constant 0 : index
      %c0_13 = arith.constant 0 : index
      %13 = vector.load %arg5[%c0_12, %c0_13] : memref<16x96xf32, #tpu.memory_space<vmem>>, vector<16x96xf32>
      tpu.vector_store %arg5[%c0_12, %c0_13], %12 {strides = array<i32>} : memref<16x96xf32, #tpu.memory_space<vmem>>, vector<16x96xf32>,
    } else {
    }
    return
  }
  func.func @transform_0(%arg0: i32, %arg1: i32, %arg2: i32) -> (i32, i32) {
    %c0_i32 = arith.constant 0 : i32
    return %arg0, %arg2 : i32, i32
  }
  func.func @transform_1(%arg0: i32, %arg1: i32, %arg2: i32) -> (i32, i32) {
    %c0_i32 = arith.constant 0 : i32
    return %arg2, %arg1 : i32, i32
  }
  func.func @transform_2(%arg0: i32, %arg1: i32, %arg2: i32) -> (i32, i32) {
    %c0_i32 = arith.constant 0 : i32
    return %arg0, %arg1 : i32, i32
  }
}

</mosaic_0001>

<llo_original>
// kernel: tpu_custom_call.1
$region0: #{tpu_custom_call.1}
  #allocation0 [shape = 'u32[]', space=smem, size = 0x4, offset = 0x4, fixed_abs, tag = 'smem constant byte address 0x4 - core index']
  #allocation1 [shape = 'u32[144,128]{1,0:T(1,128)}', space=vmem, size = 0x12000, scoped, tag = 'internal scratch']
  #allocation2 [shape = 'f32[16,96]{1,0:T(8,128)}', space=vmem, size = 0x2000, scoped, tag = 'scratch operand']
  %s0 = inlined_call_operand.hbm [shape: f32[16,32], index: 0, kind: input, shape index: {}]
  %s1 = inlined_call_operand.hbm [shape: f32[32,96], index: 1, kind: input, shape index: {}]
  %s2 = inlined_call_operand.hbm [shape: f32[16,96], index: 2, kind: output, shape index: {}]
  %s3 = sld [smem:[#allocation0]]
  $region34: #{tpu_custom_call.1} parent=0
    _
  %s5 = ssub.s32 1, %s3
  %s6 = scalar_select 0, %s5, %s3
  $region1: #{tpu_custom_call.1} parent=0
    #allocation3 [shape = 'u8[8192]{0}', space=vmem, size = 0x2000, scoped, tag = 'input window, operand 0, single buffered']
    #allocation4 [shape = 's32[1]{0}', space=sflag, size = 0x4, scoped, tag = 'scoped memory for tpu_custom_call.1']
    #allocation5 [shape = 's32[1]{0}', space=sflag, size = 0x4, scoped, tag = 'scoped memory for tpu_custom_call.1']
    #allocation6 [shape = 'u8[16384]{0}', space=vmem, size = 0x4000, scoped, tag = 'input window, operand 1, single buffered']
    #allocation7 [shape = 's32[1]{0}', space=sflag, size = 0x4, scoped, tag = 'scoped memory for tpu_custom_call.1']
    #allocation8 [shape = 'u8[8192]{0}', space=vmem, size = 0x2000, scoped, tag = 'output window, operand 0, single buffered']
    %7 = vsyncpa [#allocation4], 0
    %8 = vsyncpa [#allocation7], 0
    %9 = vsyncpa [#allocation5], 0
    // Predicated region
    $region2: #{tpu_custom_call.1} parent=1 // pred_check
      _
    $region3: #{tpu_custom_call.1} parent=1 // pred_check_branch
      %11 = sbr.rel (0) target = $region5
    $region4: #{tpu_custom_call.1} parent=1 // pred_region
      %s13 = ssub.s32 256, 256
      %14 = vsyncadd [#allocation4], %s13
      %s15 = sshll.u32 [#allocation3], 4
      %s16 = int_to_ptr.vmem [resolvable:$true] %s15
      %21 = dma.hbm_to_vmem [thread:$0]  %s0, 256, %s16, [#allocation4], 128, 128, 8
    $region5: #{tpu_custom_call.1} parent=1 // pred_fallthru
      _
    // Predicated region
    $region6: #{tpu_custom_call.1} parent=1 // pred_check
      _
    $region7: #{tpu_custom_call.1} parent=1 // pred_check_branch
      %23 = sbr.rel (0) target = $region9
    $region8: #{tpu_custom_call.1} parent=1 // pred_region
      %s25 = ssub.s32 512, 512
      %26 = vsyncadd [#allocation7], %s25
      %s27 = sshll.u32 [#allocation6], 4
      %s28 = int_to_ptr.vmem [resolvable:$true] %s27
      %33 = dma.hbm_to_vmem [thread:$0]  %s1, 512, %s28, [#allocation7], 128, 128, 8
    $region9: #{tpu_custom_call.1} parent=1 // pred_fallthru
      _
    // Predicated region
    $region10: #{tpu_custom_call.1} parent=1 // pred_check
      _
    $region11: #{tpu_custom_call.1} parent=1 // pred_check_branch
      %35 = sbr.rel (0) target = $region13
    $region12: #{tpu_custom_call.1} parent=1 // pred_region
      %36 = dma.done [#allocation4], 256
    $region13: #{tpu_custom_call.1} parent=1 // pred_fallthru
      _
    // Predicated region
    $region14: #{tpu_custom_call.1} parent=1 // pred_check
      _
    $region15: #{tpu_custom_call.1} parent=1 // pred_check_branch
      %38 = sbr.rel (0) target = $region17
    $region16: #{tpu_custom_call.1} parent=1 // pred_region
      %39 = dma.done [#allocation7], 512
    $region17: #{tpu_custom_call.1} parent=1 // pred_fallthru
      _
    %p40 = scmp.eq.s32.totalorder 0, 0
    // Predicated region
    $region18: #{tpu_custom_call.1} parent=1 // pred_check
      %p41 = pneg %p40
    $region19: #{tpu_custom_call.1} parent=1 // pred_check_branch
      %43 = sbr.rel (%p41) target = $region21
    $region20: #{tpu_custom_call.1} parent=1 // pred_region
      %vm44 = vcmask 785408
      %45 = vst.msk [vmem:[#allocation2] sm:$0xff] %vm44, 0.0
      %46 = vst.msk [vmem:[#allocation2 + $0x8] sm:$0xff] %vm44, 0.0
    $region21: #{tpu_custom_call.1} parent=1 // pred_fallthru
      _
    %v47 = vld [vmem:[#allocation2] sm:$0xff]
    %v48 = vld [vmem:[#allocation2 + $0x8] sm:$0xff]
    %v49 = vld [vmem:[#allocation3] sm:$0xff]
    %v50 = vld [vmem:[#allocation3 + $0x8] sm:$0xff]
    %v51 = vld [vmem:[#allocation6] sm:$0xff]
    %v52 = vld [vmem:[#allocation6 + $0x8] sm:$0xff]
    %v53 = vld [vmem:[#allocation6 + $0x10] sm:$0xff]
    %v54 = vld [vmem:[#allocation6 + $0x18] sm:$0xff]
    %vm55 = vcmask 261120
    %v57 = vsel %vm55, %v49, 0
    %v60 = vsel %vm55, %v50, 0
    %62 = vmatprep.subr.mxu0 0.0
    %63 = vmatpush1.msra.mxu0 %v51
    %64 = vmatprep.subr.mxu0 0.0
    %65 = vmatpush1.msra.mxu0 %v52
    %66 = vmatprep.subr.mxu0 0.0
    %67 = vmatpush1.msra.mxu0 %v53
    %68 = vmatprep.subr.mxu0 0.0
    %69 = vmatpush1.msra.mxu0 %v54
    %70 = vmatprep.subr.mxu0 0.0
    %71 = vmatpush1.msra.mxu0 0.0
    %72 = vmatprep.subr.mxu0 0.0
    %73 = vmatpush1.msra.mxu0 0.0
    %74 = vmatprep.subr.mxu0 0.0
    %75 = vmatpush1.msra.mxu0 0.0
    %76 = vmatprep.subr.mxu0 0.0
    %77 = vmatpush1.msra.mxu0 0.0
    %78 = vmatprep.subr.mxu0 0.0
    %79 = vmatpush1.msra.mxu0 0.0
    %80 = vmatprep.subr.mxu0 0.0
    %81 = vmatpush1.msra.mxu0 0.0
    %82 = vmatprep.subr.mxu0 0.0
    %83 = vmatpush1.msra.mxu0 0.0
    %84 = vmatprep.subr.mxu0 0.0
    %85 = vmatpush1.msra.mxu0 0.0
    %86 = vmatprep.subr.mxu0 0.0
    %87 = vmatpush1.msra.mxu0 0.0
    %88 = vmatprep.subr.mxu0 0.0
    %89 = vmatpush1.msra.mxu0 0.0
    %90 = vmatprep.subr.mxu0 0.0
    %91 = vmatpush1.msra.mxu0 0.0
    %92 = vmatprep.subr.mxu0 0.0
    %93 = vmatpush1.msra.mxu0 0.0
    %94 = vmatprep.subr.mxu0 0.0
    %95 = vmatpush1.msra.mxu0 0.0
    %96 = vmatprep.subr.mxu0 0.0
    %97 = vmatpush1.msra.mxu0 0.0
    %98 = vmatprep.subr.mxu0 0.0
    %99 = vmatpush1.msra.mxu0 0.0
    %100 = vmatprep.subr.mxu0 0.0
    %101 = vmatpush1.msra.mxu0 0.0
    %102 = vmatprep.subr.mxu0 0.0
    %103 = vmatpush1.msra.mxu0 0.0
    %104 = vmatprep.subr.mxu0 0.0
    %105 = vmatpush1.msra.mxu0 0.0
    %106 = vmatprep.subr.mxu0 0.0
    %107 = vmatpush1.msra.mxu0 0.0
    %108 = vmatprep.subr.mxu0 0.0
    %109 = vmatpush1.msra.mxu0 0.0
    %110 = vmatprep.subr.mxu0 0.0
    %111 = vmatpush1.msra.mxu0 0.0
    %112 = vmatprep.subr.mxu0 0.0
    %113 = vmatpush1.msra.mxu0 0.0
    %114 = vmatprep.subr.mxu0 0.0
    %115 = vmatpush1.msra.mxu0 0.0
    %116 = vmatprep.subr.mxu0 0.0
    %117 = vmatpush1.msra.mxu0 0.0
    %118 = vmatprep.subr.mxu0 0.0
    %119 = vmatpush1.msra.mxu0 0.0
    %120 = vmatprep.subr.mxu0 0.0
    %121 = vmatpush1.msra.mxu0 0.0
    %122 = vmatprep.subr.mxu0 0.0
    %123 = vmatpush1.msra.mxu0 0.0
    %124 = vmatprep.subr.mxu0 0.0
    %125 = vmatpush1.msra.mxu0 0.0
    %126 = vmatprep.mubr.f32.mxu0 0.0
    %127 = vmatmul.mubr.f32.gmra.mrb[0].mxu0 %v57
    %v128 = vpop.f32.mrb[0].mxu0
    %v129 = vadd.f32 0.0, %v128
    %v130 = vpop.f32.mrb[0].mxu0
    %131 = vmatprep.mubr.f32.mxu0 0.0
    %132 = vmatmul.mubr.f32.gmra.mrb[0].mxu0 %v60
    %v133 = vpop.f32.mrb[0].mxu0
    %v134 = vadd.f32 0.0, %v133
    %v135 = vpop.f32.mrb[0].mxu0
    %136 = vdwg.mxu0
    %v137 = vadd.f32 %v47, %v129
    %v138 = vadd.f32 %v48, %v134
    %vm139 = vcmask 785408
    %140 = vst.msk [vmem:[#allocation2] sm:$0xff] %vm139, %v137
    %141 = vst.msk [vmem:[#allocation2 + $0x8] sm:$0xff] %vm139, %v138
    // Predicated region
    $region22: #{tpu_custom_call.1} parent=1 // pred_check
      %p142 = pneg %p40
    $region23: #{tpu_custom_call.1} parent=1 // pred_check_branch
      %144 = sbr.rel (%p142) target = $region25
    $region24: #{tpu_custom_call.1} parent=1 // pred_region
      %v145 = vld [vmem:[#allocation2] sm:$0xff]
      %v146 = vld [vmem:[#allocation2 + $0x8] sm:$0xff]
      %147 = vst.msk [vmem:[#allocation8] sm:$0xff] %vm139, %v145
      %148 = vst.msk [vmem:[#allocation8 + $0x8] sm:$0xff] %vm139, %v146
    $region25: #{tpu_custom_call.1} parent=1 // pred_fallthru
      _
    // Predicated region
    $region26: #{tpu_custom_call.1} parent=1 // pred_check
      _
    $region27: #{tpu_custom_call.1} parent=1 // pred_check_branch
      %150 = sbr.rel (0) target = $region29
    $region28: #{tpu_custom_call.1} parent=1 // pred_region
      %s152 = ssub.s32 256, 256
      %153 = vsyncadd [#allocation5], %s152
      %s154 = sshll.u32 [#allocation8], 4
      %s155 = int_to_ptr.vmem [resolvable:$true] %s154
      %160 = dma.vmem_to_hbm [thread:$0]  %s155, 256, %s2, [#allocation5], 128, 128, 8
    $region29: #{tpu_custom_call.1} parent=1 // pred_fallthru
      _
    // Predicated region
    $region30: #{tpu_custom_call.1} parent=1 // pred_check
      _
    $region31: #{tpu_custom_call.1} parent=1 // pred_check_branch
      %162 = sbr.rel (0) target = $region33
    $region32: #{tpu_custom_call.1} parent=1 // pred_region
      %163 = dma.done [#allocation5], 256
    $region33: #{tpu_custom_call.1} parent=1 // pred_fallthru
      _
    %164 = vsyncpa [#allocation4], 1
    %165 = vsyncpa [#allocation7], 1
    %166 = vsyncpa [#allocation5], 1

</llo_original>
